<compile_context>
chip_gen: v7x
topology: tpu7x:2x2x1
jax: 0.10.0
libtpu: 0.0.40
codegen_flags: <defaults>
</compile_context>

<pallas_src>
import jax
import jax.numpy as jnp
from jax import lax
from jax.experimental import pallas as pl
from jax.experimental.pallas import tpu as pltpu


def _round_up(a: int, b: int) -> int:
    return -(-a // b) * b


def _vmem_capacity_bytes() -> int:
    """Physical VMEM of the current generation; conservative 64 MiB (v7x) fallback."""
    try:
        cap = int(pltpu.get_tpu_info().vmem_capacity_bytes)
        if cap > 0:
            return cap
    except Exception:
        pass
    return 64 << 20


def _pick_tile_l(L: int, per_row_bytes: int, fixed_bytes: int,
                 vmem_cap: int, align: int) -> int:
    """Largest L tile (multiple of `align`) whose pipelined working set fits in about
    half of this generation's VMEM after subtracting the resident weight/bias/halo
    footprint.  Targets ~1024 rows to amortize the ~0.35 us per-grid-step overhead
    (big tiles on v5e/v6e's 128 MiB, automatically tighter on v7x's 64 MiB)."""
    budget = max(vmem_cap // 2 - fixed_bytes, 1 << 20)
    max_rows = max(align, (budget // max(per_row_bytes, 1)) // align * align)
    tl = min(1024, max_rows)
    if L <= tl:
        return _round_up(max(L, 1), align)
    return max(align, (tl // align) * align)


def _masked_conv1d_kernel(x_ref, h_ref, w_ref, b_ref, o_ref):
    """One (batch, L-tile) grid step: halo-extended tile -> `cutoff` accumulated matmuls.

    x_ref: (1, TL, C_in)          main tile of the left-'same'-padded input
    h_ref: (1, Hb, C_in)          halo rows immediately following the main tile
    w_ref: (cutoff, C_in, Cop)    masked weights; dead taps already dropped
    b_ref: (1, Cop)               f32 bias (zero-padded to lane width)
    o_ref: (1, TL, Cop)           output tile (lane-dense store)
    """
    cutoff = w_ref.shape[0]
    tl = x_ref.shape[1]
    if cutoff == 1:
        acc = jnp.dot(x_ref[0], w_ref[0], preferred_element_type=jnp.float32)
    else:
        # In-VMEM halo concat + static sublane shifts (XLU work only; no extra HBM).
        xh = jnp.concatenate([x_ref[0], h_ref[0]], axis=0)   # (TL + Hb, C_in)
        acc = jnp.dot(xh[:tl], w_ref[0], preferred_element_type=jnp.float32)
        for k in range(1, cutoff):
            acc = acc + jnp.dot(xh[k:k + tl], w_ref[k],
                                preferred_element_type=jnp.float32)
    o_ref[0] = (acc + b_ref[...]).astype(o_ref.dtype)


def masked_conv1d_nlc(x_nlc, weight, bias, mask_type, *, compute_dtype=jnp.bfloat16):
    """Masked Conv1d forward on channels-last activations.

    x_nlc : (N, L, C_in)
    weight: (C_out, C_in, K)   (PyTorch nn.Conv1d layout)
    bias  : (C_out,)
    compute_dtype: MXU input dtype for x / weights (default bf16; accumulation and
                   bias stay f32).  Pass None (or jnp.float32) for the exact-f32 path.
    returns (N, L, C_out)   ('same' padding = K // 2, stride 1)
    """
    assert mask_type in ("A", "B")
    N, L, C_in = x_nlc.shape
    C_out, C_in_w, K = weight.shape
    assert C_in_w == C_in
    # PyTorch 'same'-style output length only matches for odd K with padding=K//2.
    assert K % 2 == 1, "MaskedConv1D kernel assumes an odd kernel size"
    pad = K // 2
    cutoff = pad + (1 if mask_type == "B" else 0)     # number of live (un-masked) taps
    out_dtype = x_nlc.dtype

    if cutoff == 0:   # K == 1 with mask 'A': every tap masked -> output is just bias.
        return jnp.broadcast_to(bias.astype(out_dtype)[None, None, :], (N, L, C_out))

    cdt = jnp.dtype(x_nlc.dtype) if compute_dtype is None else jnp.dtype(compute_dtype)

    # ---- weights: drop statically-masked taps; (cutoff, C_in, C_out); lane-pad C_out.
    w_live = jnp.transpose(weight[:, :, :cutoff], (2, 1, 0))        # (cutoff, C_in, C_out)
    # 256-wide MXU columns (v6e/v7x) only when the contraction is big enough to be
    # compute-bound; otherwise keep 128 to avoid extra output HBM bytes.
    lane_pad = 256 if cutoff * C_in >= 256 else 128
    C_out_p = _round_up(C_out, lane_pad)
    if C_out_p != C_out:
        w_live = jnp.pad(w_live, ((0, 0), (0, 0), (0, C_out_p - C_out)))
        bias_p = jnp.pad(bias, (0, C_out_p - C_out))
    else:
        bias_p = bias
    w_live = w_live.astype(cdt)
    b2d = bias_p.reshape(1, C_out_p).astype(jnp.float32)

    in_be = cdt.itemsize
    out_be = jnp.dtype(out_dtype).itemsize

    # ---- tiling (halo rows = next-tile lookahead needed by taps k >= 1)
    Hb = _round_up(max(cutoff - 1, 1), 8)
    tl_align = Hb if Hb % 16 == 0 else 2 * Hb         # multiple of Hb and 16 (bf16 packing)

    vmem_cap = _vmem_capacity_bytes()
    fixed = (2 * cutoff * C_in * C_out_p * in_be      # double-buffered resident weight
             + 2 * C_out_p * 4                        # double-buffered bias
             + 2 * Hb * C_in * in_be)                 # double-buffered halo block
    per_row = (4 * C_in * in_be                       # x block (2 bufs) + in-kernel copies
               + 2 * C_out_p * out_be                 # output block (2 bufs)
               + 4 * C_out_p)                         # f32 accumulator
    TL = _pick_tile_l(L, per_row, fixed, vmem_cap, tl_align)
    # v7x megacore: keep >= 2 parallel grid steps for single-sample inference.
    if N == 1 and TL >= L and L > tl_align:
        TL = _round_up(-(-L // 2), tl_align)
    num_tiles = -(-L // TL)
    halo_stride = TL // Hb                            # halo block-index step per L tile

    # ---- input: left 'same' pad + trailing zeros so every halo block is in bounds.
    # One fused XLA pad+cast pass; the old HBM im2col buffer is gone.
    L_x = max(num_tiles * TL + Hb, pad + L)
    x_p = jnp.pad(x_nlc.astype(cdt), ((0, 0), (pad, L_x - pad - L), (0, 0)))

    vmem_est = fixed + per_row * TL + (TL + Hb) * C_in * in_be
    vmem_limit = int(min(max(2 * vmem_est, 32 << 20), vmem_cap - (8 << 20)))
    vmem_limit = max(vmem_limit, vmem_est + (2 << 20))  # never below estimated usage

    out_padded = pl.pallas_call(
        _masked_conv1d_kernel,
        out_shape=jax.ShapeDtypeStruct((N, num_tiles * TL, C_out_p), out_dtype),
        grid_spec=pltpu.PrefetchScalarGridSpec(
            num_scalar_prefetch=0,
            grid=(N, num_tiles),
            in_specs=[
                pl.BlockSpec((1, TL, C_in), lambda n, t: (n, t, 0)),
                pl.BlockSpec((1, Hb, C_in),
                             lambda n, t: (n, (t + 1) * halo_stride, 0)),
                pl.BlockSpec((cutoff, C_in, C_out_p), lambda n, t: (0, 0, 0)),
                pl.BlockSpec((1, C_out_p), lambda n, t: (0, 0)),
            ],
            out_specs=pl.BlockSpec((1, TL, C_out_p), lambda n, t: (n, t, 0)),
        ),
        compiler_params=pltpu.CompilerParams(
            dimension_semantics=("parallel", "parallel"),
            vmem_limit_bytes=vmem_limit,
        ),
    )(x_p, x_p, w_live, b2d)

    return out_padded[:, :L, :C_out]


def masked_conv1d(x_ncl, weight, bias, mask_type, **kwargs):
    """PyTorch-layout entry point: x (N, C_in, L) -> (N, C_out, L).

    NOTE: the two transposes are full extra activation HBM passes; for bandwidth-
    bound stacks prefer masked_conv1d_nlc with channels-last activations end-to-end.
    """
    x_nlc = jnp.transpose(x_ncl, (0, 2, 1))
    out_nlc = masked_conv1d_nlc(x_nlc, weight, bias, mask_type, **kwargs)
    return jnp.transpose(out_nlc, (0, 2, 1))


def _reference(x_ncl, weight, bias, mask_type):
    """Independent reference using lax.conv_general_dilated (matches nn.Conv1d)."""
    K = weight.shape[-1]
    cutoff = K // 2 + (1 if mask_type == "B" else 0)
    mask = (jnp.arange(K) < cutoff).astype(weight.dtype)
    w_masked = weight * mask[None, None, :]
    pad = K // 2
    out = lax.conv_general_dilated(
        x_ncl, w_masked, window_strides=(1,), padding=[(pad, pad)],
        dimension_numbers=("NCH", "OIH", "NCH"))
    return out + bias[None, :, None]


if __name__ == "__main__":
    key = jax.random.PRNGKey(0)
    kx, kw, kb, kx2 = jax.random.split(key, 4)

    # Small shapes consistent with nn.Conv1d(in_channels=4, out_channels=8,
    # kernel_size=5, padding=2) wrapped by MaskedConv1D.
    N, C_in, C_out, L, K = 2, 4, 8, 16, 5
    x = jax.random.normal(kx, (N, C_in, L), dtype=jnp.float32)
    weight = jax.random.normal(kw, (C_out, C_in, K), dtype=jnp.float32) * 0.1
    bias = jax.random.normal(kb, (C_out,), dtype=jnp.float32) * 0.1

    ok = True

    # Exact-f32 path for both mask types.
    for mask_type in ("A", "B"):
        out = jax.block_until_ready(
            masked_conv1d(x, weight, bias, mask_type, compute_dtype=jnp.float32))
        ref = _reference(x, weight, bias, mask_type)
        if out.shape != (N, C_out, L) or not jnp.allclose(out, ref, rtol=1e-5, atol=1e-5):
            ok = False

    # Length not a multiple of the tile alignment: exercises padding + halo path.
    L2 = 20
    x2 = jax.random.normal(kx2, (N, C_in, L2), dtype=jnp.float32)
    out2 = jax.block_until_ready(
        masked_conv1d(x2, weight, bias, "B", compute_dtype=jnp.float32))
    ref2 = _reference(x2, weight, bias, "B")
    if out2.shape != (N, C_out, L2) or not jnp.allclose(out2, ref2, rtol=1e-5, atol=1e-5):
        ok = False

    # Default bf16 MXU-input path (f32 accumulation), checked against a reference
    # whose inputs are rounded to bf16 the same way.
    x_bf = x.astype(jnp.bfloat16).astype(jnp.float32)
    w_bf = weight.astype(jnp.bfloat16).astype(jnp.float32)
    for mask_type in ("A", "B"):
        out_bf = jax.block_until_ready(masked_conv1d(x, weight, bias, mask_type))
        ref_bf = _reference(x_bf, w_bf, bias, mask_type)
        if out_bf.shape != (N, C_out, L) or not jnp.allclose(out_bf, ref_bf,
                                                             rtol=1e-3, atol=1e-3):
            ok = False

    # K == 1 with mask 'A' (every tap masked) degenerates to a bias-only output.
    w1 = jax.random.normal(kw, (C_out, C_in, 1), dtype=jnp.float32)
    out1 = jax.block_until_ready(masked_conv1d(x, w1, bias, "A"))
    ref1 = _reference(x, w1, bias, "A")
    if out1.shape != (N, C_out, L) or not jnp.allclose(out1, ref1, rtol=1e-5, atol=1e-5):
        ok = False

    print("KERNEL_OK" if ok else "KERNEL_MISMATCH")
</pallas_src>

<mosaic_0001>
module attributes {stable_mosaic.version = 11 : i64} {
  func.func @_masked_conv1d_kernel(%arg0: i32, %arg1: i32, %arg2: memref<1x16x4xf32, #tpu.memory_space<vmem>>, %arg3: memref<1x8x4xf32, #tpu.memory_space<vmem>>, %arg4: memref<2x4x128xf32, #tpu.memory_space<vmem>>, %arg5: memref<1x128xf32, #tpu.memory_space<vmem>>, %arg6: memref<1x16x128xf32, #tpu.memory_space<vmem>>) attributes {dimension_semantics = [#tpu.dimension_semantics<parallel>, #tpu.dimension_semantics<parallel>], iteration_bounds = array<i64: 2, 1>, scalar_prefetch = 0 : i64, scratch_operands = 0 : i64, tpu.core_type = #tpu.core_type<tc>, window_params = [{transform_indices = @transform_0, window_bounds = array<i64: 1, 16, 4>}, {transform_indices = @transform_1, window_bounds = array<i64: 1, 8, 4>}, {pipeline_mode = #tpu.pipeline_mode<synchronous>, transform_indices = @transform_2, window_bounds = array<i64: 2, 4, 128>}, {pipeline_mode = #tpu.pipeline_mode<synchronous>, transform_indices = @transform_3, window_bounds = array<i64: 1, 128>}, {transform_indices = @transform_4, window_bounds = array<i64: 1, 16, 128>}]} {
    %c0 = arith.constant 0 : index
    %c0_0 = arith.constant 0 : index
    %c0_1 = arith.constant 0 : index
    %0 = vector.load %arg2[%c0, %c0_0, %c0_1] : memref<1x16x4xf32, #tpu.memory_space<vmem>>, vector<1x16x4xf32>
    %1 = vector.shape_cast %0 : vector<1x16x4xf32> to vector<16x4xf32>
    %c0_2 = arith.constant 0 : index
    %c0_3 = arith.constant 0 : index
    %c0_4 = arith.constant 0 : index
    %2 = vector.load %arg3[%c0_2, %c0_3, %c0_4] : memref<1x8x4xf32, #tpu.memory_space<vmem>>, vector<1x8x4xf32>
    %3 = vector.shape_cast %2 : vector<1x8x4xf32> to vector<8x4xf32>
    %4 = tpu.concatenate %1, %3 in 0 : vector<16x4xf32>, vector<8x4xf32> -> vector<24x4xf32>
    %5 = vector.extract_strided_slice %4 {offsets = [0, 0], sizes = [16, 4], strides = [1, 1]} : vector<24x4xf32> to vector<16x4xf32>
    %c0_5 = arith.constant 0 : index
    %c0_6 = arith.constant 0 : index
    %c0_7 = arith.constant 0 : index
    %6 = vector.load %arg4[%c0_5, %c0_6, %c0_7] : memref<2x4x128xf32, #tpu.memory_space<vmem>>, vector<1x4x128xf32>
    %7 = vector.shape_cast %6 : vector<1x4x128xf32> to vector<4x128xf32>
    %cst = arith.constant dense<0.000000e+00> : vector<16x128xf32>
    %8 = tpu.matmul %5, %7, %cst {dimension_numbers = #tpu.dot_dimension_numbers<[1], [0], [0], [1], [0, 0, 1, 1], [], []>} : vector<16x4xf32>, vector<4x128xf32>, vector<16x128xf32> -> vector<16x128xf32>
    %9 = vector.extract_strided_slice %4 {offsets = [1, 0], sizes = [16, 4], strides = [1, 1]} : vector<24x4xf32> to vector<16x4xf32>
    %c1 = arith.constant 1 : index
    %c0_8 = arith.constant 0 : index
    %c0_9 = arith.constant 0 : index
    %10 = vector.load %arg4[%c1, %c0_8, %c0_9] : memref<2x4x128xf32, #tpu.memory_space<vmem>>, vector<1x4x128xf32>
    %11 = vector.shape_cast %10 : vector<1x4x128xf32> to vector<4x128xf32>
    %cst_10 = arith.constant dense<0.000000e+00> : vector<16x128xf32>
    %12 = tpu.matmul %9, %11, %cst_10 {dimension_numbers = #tpu.dot_dimension_numbers<[1], [0], [0], [1], [0, 0, 1, 1], [], []>} : vector<16x4xf32>, vector<4x128xf32>, vector<16x128xf32> -> vector<16x128xf32>
    %13 = arith.addf %8, %12 : vector<16x128xf32>
    %c0_11 = arith.constant 0 : index
    %c0_12 = arith.constant 0 : index
    %14 = vector.load %arg5[%c0_11, %c0_12] : memref<1x128xf32, #tpu.memory_space<vmem>>, vector<1x128xf32>
    %15 = vector.broadcast %14 : vector<1x128xf32> to vector<16x128xf32>
    %16 = arith.addf %13, %15 : vector<16x128xf32>
    %c0_13 = arith.constant 0 : index
    %c0_14 = arith.constant 0 : index
    %c0_15 = arith.constant 0 : index
    %17 = vector.load %arg6[%c0_13, %c0_14, %c0_15] : memref<1x16x128xf32, #tpu.memory_space<vmem>>, vector<1x16x128xf32>
    %18 = vector.shape_cast %17 : vector<1x16x128xf32> to vector<16x128xf32>
    %19 = vector.shape_cast %16 : vector<16x128xf32> to vector<1x16x128xf32>
    tpu.vector_store %arg6[%c0_13, %c0_14, %c0_15], %19 {strides = array<i32>} : memref<1x16x128xf32, #tpu.memory_space<vmem>>, vector<1x16x128xf32>,
    return
  }
  func.func @transform_0(%arg0: i32, %arg1: i32) -> (i32, i32, i32) {
    %c0_i32 = arith.constant 0 : i32
    %c0_i32_0 = arith.constant 0 : i32
    return %arg0, %arg1, %c0_i32 : i32, i32, i32
  }
  func.func @transform_1(%arg0: i32, %arg1: i32) -> (i32, i32, i32) {
    %c1_i32 = arith.constant 1 : i32
    %0 = arith.addi %arg1, %c1_i32 : i32
    %c2_i32 = arith.constant 2 : i32
    %1 = arith.muli %0, %c2_i32 : i32
    %c0_i32 = arith.constant 0 : i32
    %c0_i32_0 = arith.constant 0 : i32
    return %arg0, %1, %c0_i32 : i32, i32, i32
  }
  func.func @transform_2(%arg0: i32, %arg1: i32) -> (i32, i32, i32) {
    %c0_i32 = arith.constant 0 : i32
    %c0_i32_0 = arith.constant 0 : i32
    %c0_i32_1 = arith.constant 0 : i32
    %c0_i32_2 = arith.constant 0 : i32
    return %c0_i32, %c0_i32_0, %c0_i32_1 : i32, i32, i32
  }
  func.func @transform_3(%arg0: i32, %arg1: i32) -> (i32, i32) {
    %c0_i32 = arith.constant 0 : i32
    %c0_i32_0 = arith.constant 0 : i32
    %c0_i32_1 = arith.constant 0 : i32
    return %c0_i32, %c0_i32_0 : i32, i32
  }
  func.func @transform_4(%arg0: i32, %arg1: i32) -> (i32, i32, i32) {
    %c0_i32 = arith.constant 0 : i32
    %c0_i32_0 = arith.constant 0 : i32
    return %arg0, %arg1, %c0_i32 : i32, i32, i32
  }
}

</mosaic_0001>

<llo_original>
// kernel: tpu_custom_call.1
$region0: #{tpu_custom_call.1}
  #allocation0 [shape = 'u32[]', space=smem, size = 0x4, offset = 0x4, fixed_abs, tag = 'smem constant byte address 0x4 - core index']
  #allocation1 [shape = 'u32[144,128]{1,0:T(1,128)}', space=vmem, size = 0x12000, scoped, tag = 'internal scratch']
  %s0 = inlined_call_operand.vmem [shape: f32[2,24,4], index: 0, kind: input, shape index: {}]
  %s1 = inlined_call_operand.vmem [shape: f32[2,24,4], index: 1, kind: input, shape index: {}]
  %s2 = inlined_call_operand.vmem [shape: f32[2,4,128], index: 2, kind: input, shape index: {}]
  %s3 = inlined_call_operand.vmem [shape: f32[1,128], index: 3, kind: input, shape index: {}]
  %s4 = inlined_call_operand.hbm [shape: f32[2,16,128], index: 4, kind: output, shape index: {}]
  %s5 = sld [smem:[#allocation0]]
  $region49: #{tpu_custom_call.1} parent=0
    _
  %s7 = ssub.s32 1, %s5
  %s8 = scalar_select 0, %s7, %s5
  $region1: #{tpu_custom_call.1} parent=0
    #allocation2 [shape = 'u8[16384]{0}', space=vmem, size = 0x4000, scoped, tag = 'output window, operand 0']
    #allocation3 [shape = 's32[2]{0}', space=sflag, size = 0x8, scoped, tag = 'scoped memory for tpu_custom_call.1']
    %9 = vsyncpa [#allocation3], 0
    %s10 = scalar_lea.sflag [#allocation3], 1
    %11 = vsyncpa %s10, 0
    loop: start=0, step=1, limit=4
    $region2: #{tpu_custom_call.1} parent=1 // loop_pre_header
      _
    $region3: #{tpu_custom_call.1} parent=1 // loop_header
      %s13 = sphi 0, %s17
      %p14 = scmp.ge.s32.totalorder %s13, 4
      %s20 = sphi 0, %s32
      %s21 = sphi 0, %s28
      %s22 = sphi 0, %s20
      %s23 = sphi 0, %s21
      %s24 = sphi 0, %s22
      %s25 = sphi 0, %s23
      %s37 = sphi 0, %s39
      %s40 = sphi 0, %s37
      %s41 = sphi 0, %s40
      %s57 = sphi 0, %s41
      %s69 = sphi 0, %s71
      %s72 = sphi 0, %s69
      %s73 = sphi 0, %s72
      %s89 = sphi 0, %s73
      %s93 = sphi 0, %s93
      %s95 = sphi 0, %s93
      %s96 = sphi 0, %s95
      %s110 = sphi 0, %s96
      %s114 = sphi 0, %s114
      %s116 = sphi 0, %s114
      %s117 = sphi 0, %s116
      %s131 = sphi 0, %s117
      %s139 = sphi 0, %s141
      %s142 = sphi 0, %s139
      %s143 = sphi 0, %s142
      %s159 = sphi 0, %s143
    $region4: #{tpu_custom_call.1} parent=1 // loop_header_branch
      %16 = sbr.rel (%p14) target = $region8
    $region5: #{tpu_custom_call.1} parent=1 // loop_body
      %s18 = ssub.s32 %s13, 1
      %s19 = ssub.s32 %s13, 2
      %s26 = sadd.s32 1, %s21
      %p27 = scmp.ge.s32.totalorder %s26, 1
      %s28 = scalar_select %p27, 0, %s26
      %s29 = sadd.s32 1, %s20
      %s30 = scalar_select %p27, %s29, %s20
      %p31 = scmp.ge.s32.totalorder %s30, 2
      %s32 = scalar_select %p31, 0, %s30
      %s33 = ssub.s32 %s20, %s32
      %s34 = ssub.s32 %s21, %s28
      %s35 = sor.u32 %s33, %s34
      %p36 = scmp.eq.s32.totalorder %s35, 0
      %s38 = sadd.s32 %s37, 1
      %s39 = scalar_select %p36, %s37, %s38
      %p42 = pneg %p36
      %p43 = scmp.eq.s32.totalorder %s13, 1
      %p44 = por %p42, %p43
      %p45 = scmp.ne.s32.totalorder %s37, %s40
      %p46 = scmp.eq.s32.totalorder %s13, 0
      %p47 = por %p45, %p46
      %p48 = scmp.ne.s32.totalorder %s37, %s40
      %p49 = scmp.eq.s32.totalorder %s18, 1
      %p50 = por %p48, %p49
      %p51 = scmp.ne.s32.totalorder %s40, %s41
      %p52 = scmp.eq.s32.totalorder %s18, 0
      %p53 = por %p51, %p52
      %p54 = scmp.ne.s32.totalorder %s40, %s41
      %p55 = scmp.eq.s32.totalorder %s19, 1
      %p56 = por %p54, %p55
      %p58 = scmp.ne.s32.totalorder %s41, %s57
      %p59 = scmp.eq.s32.totalorder %s19, 0
      %p60 = por %p58, %p59
      %s61 = sadd.s32 %s21, 1
      %s62 = smul.u32 %s61, 2
      %s63 = sadd.s32 %s28, 1
      %s64 = smul.u32 %s63, 2
      %s65 = ssub.s32 %s20, %s32
      %s66 = ssub.s32 %s62, %s64
      %s67 = sor.u32 %s65, %s66
      %p68 = scmp.eq.s32.totalorder %s67, 0
      %s70 = sadd.s32 %s69, 1
      %s71 = scalar_select %p68, %s69, %s70
      %p74 = pneg %p68
      %p75 = scmp.eq.s32.totalorder %s13, 1
      %p76 = por %p74, %p75
      %p77 = scmp.ne.s32.totalorder %s69, %s72
      %p78 = scmp.eq.s32.totalorder %s13, 0
      %p79 = por %p77, %p78
      %p80 = scmp.ne.s32.totalorder %s69, %s72
      %p81 = scmp.eq.s32.totalorder %s18, 1
      %p82 = por %p80, %p81
      %p83 = scmp.ne.s32.totalorder %s72, %s73
      %p84 = scmp.eq.s32.totalorder %s18, 0
      %p85 = por %p83, %p84
      %p86 = scmp.ne.s32.totalorder %s72, %s73
      %p87 = scmp.eq.s32.totalorder %s19, 1
      %p88 = por %p86, %p87
      %p90 = scmp.ne.s32.totalorder %s73, %s89
      %p91 = scmp.eq.s32.totalorder %s19, 0
      %p92 = por %p90, %p91
      %s94 = sadd.s32 %s93, 1
      %p97 = scmp.eq.s32.totalorder %s13, 1
      %p98 = scmp.ne.s32.totalorder %s93, %s95
      %p99 = scmp.eq.s32.totalorder %s13, 0
      %p100 = por %p98, %p99
      %p101 = scmp.ne.s32.totalorder %s93, %s95
      %p102 = scmp.eq.s32.totalorder %s18, 1
      %p103 = por %p101, %p102
      %p104 = scmp.ne.s32.totalorder %s95, %s96
      %p105 = scmp.eq.s32.totalorder %s18, 0
      %p106 = por %p104, %p105
      %p107 = scmp.ne.s32.totalorder %s95, %s96
      %p108 = scmp.eq.s32.totalorder %s19, 1
      %p109 = por %p107, %p108
      %p111 = scmp.ne.s32.totalorder %s96, %s110
      %p112 = scmp.eq.s32.totalorder %s19, 0
      %p113 = por %p111, %p112
      %s115 = sadd.s32 %s114, 1
      %p118 = scmp.eq.s32.totalorder %s13, 1
      %p119 = scmp.ne.s32.totalorder %s114, %s116
      %p120 = scmp.eq.s32.totalorder %s13, 0
      %p121 = por %p119, %p120
      %p122 = scmp.ne.s32.totalorder %s114, %s116
      %p123 = scmp.eq.s32.totalorder %s18, 1
      %p124 = por %p122, %p123
      %p125 = scmp.ne.s32.totalorder %s116, %s117
      %p126 = scmp.eq.s32.totalorder %s18, 0
      %p127 = por %p125, %p126
      %p128 = scmp.ne.s32.totalorder %s116, %s117
      %p129 = scmp.eq.s32.totalorder %s19, 1
      %p130 = por %p128, %p129
      %p132 = scmp.ne.s32.totalorder %s117, %s131
      %p133 = scmp.eq.s32.totalorder %s19, 0
      %p134 = por %p132, %p133
      %s135 = ssub.s32 %s20, %s32
      %s136 = ssub.s32 %s21, %s28
      %s137 = sor.u32 %s135, %s136
      %p138 = scmp.eq.s32.totalorder %s137, 0
      %s140 = sadd.s32 %s139, 1
      %s141 = scalar_select %p138, %s139, %s140
      %p144 = pneg %p138
      %p145 = scmp.eq.s32.totalorder %s13, 1
      %p146 = por %p144, %p145
      %p147 = scmp.ne.s32.totalorder %s139, %s142
      %p148 = scmp.eq.s32.totalorder %s13, 0
      %p149 = por %p147, %p148
      %p150 = scmp.ne.s32.totalorder %s139, %s142
      %p151 = scmp.eq.s32.totalorder %s18, 1
      %p152 = por %p150, %p151
      %p153 = scmp.ne.s32.totalorder %s142, %s143
      %p154 = scmp.eq.s32.totalorder %s18, 0
      %p155 = por %p153, %p154
      %p156 = scmp.ne.s32.totalorder %s142, %s143
      %p157 = scmp.eq.s32.totalorder %s19, 1
      %p158 = por %p156, %p157
      %p160 = scmp.ne.s32.totalorder %s143, %s159
      %p161 = scmp.eq.s32.totalorder %s19, 0
      %p162 = por %p160, %p161
      %p163 = scmp.le.s32.totalorder 1, %s13
      %p164 = scmp.lt.s32.totalorder %s13, 3
      %p165 = pnand %p163, %p164
      %p166 = pneg %p165
      // Predicated region
      $region9: #{tpu_custom_call.1} parent=5 // pred_check
        _
      $region10: #{tpu_custom_call.1} parent=5 // pred_check_branch
        %168 = sbr.rel (%p165) target = $region12
      $region11: #{tpu_custom_call.1} parent=5 // pred_region
        %s169 = ssub.s32 %s13, 1
        // Predicated region
        $region13: #{tpu_custom_call.1} parent=11 // pred_check
          %p170 = pneg %p106
        $region14: #{tpu_custom_call.1} parent=11 // pred_check_branch
          %172 = sbr.rel (%p170) target = $region16
        $region15: #{tpu_custom_call.1} parent=11 // pred_region
          _
        $region16: #{tpu_custom_call.1} parent=11 // pred_fallthru
          _
        // Predicated region
        $region17: #{tpu_custom_call.1} parent=11 // pred_check
          %p173 = pneg %p127
        $region18: #{tpu_custom_call.1} parent=11 // pred_check_branch
          %175 = sbr.rel (%p173) target = $region20
        $region19: #{tpu_custom_call.1} parent=11 // pred_region
          _
        $region20: #{tpu_custom_call.1} parent=11 // pred_fallthru
          _
      $region12: #{tpu_custom_call.1} parent=5 // pred_fallthru
        _
      %p176 = scmp.lt.s32.totalorder %s13, 2
      // Predicated region
      $region21: #{tpu_custom_call.1} parent=5 // pred_check
        %p177 = pneg %p176
      $region22: #{tpu_custom_call.1} parent=5 // pred_check_branch
        %179 = sbr.rel (%p177) target = $region24
      $region23: #{tpu_custom_call.1} parent=5 // pred_region
        // Predicated region
        $region25: #{tpu_custom_call.1} parent=23 // pred_check
          %p180 = pneg %p47
        $region26: #{tpu_custom_call.1} parent=23 // pred_check_branch
          %182 = sbr.rel (%p180) target = $region28
        $region27: #{tpu_custom_call.1} parent=23 // pred_region
          %s183 = smul.u32 2, %s21
          %s184 = ssub.s32 3, %s183
          %p185 = scmp.lt.s32.totalorder %s184, 2
          %s186 = scalar_select %p185, %s184, 2
          %s187 = smul.u32 128, %s186
          %p188 = scmp.lt.s32.totalorder %s20, 1
          %s189 = scalar_select %p188, %s20, 1
          %p190 = scmp.lt.s32.totalorder %s183, 2
          %s191 = scalar_select %p190, %s183, 2
          %s192 = smul.addr %s189, 3
          %s193 = sadd.s32 %s191, %s192
          %s194 = smul.addr %s193, 8
          %s195 = scalar_lea.vmem %s0, %s194
          %s196 = smul.u32 2, %s21
          %s197 = ssub.s32 3, %s196
          %p198 = scmp.lt.s32.totalorder %s197, 2
          %s199 = scalar_select %p198, %s197, 2
          %s200 = smul.u32 128, %s199
        $region28: #{tpu_custom_call.1} parent=23 // pred_fallthru
          _
        // Predicated region
        $region29: #{tpu_custom_call.1} parent=23 // pred_check
          %p201 = pneg %p79
        $region30: #{tpu_custom_call.1} parent=23 // pred_check_branch
          %203 = sbr.rel (%p201) target = $region32
        $region31: #{tpu_custom_call.1} parent=23 // pred_region
          %s204 = sadd.s32 %s21, 1
          %s205 = smul.u32 %s204, 2
          %p206 = scmp.lt.s32.totalorder %s20, 1
          %s207 = scalar_select %p206, %s20, 1
          %p208 = scmp.lt.s32.totalorder %s205, 2
          %s209 = scalar_select %p208, %s205, 2
          %s210 = smul.addr %s207, 3
          %s211 = sadd.s32 %s209, %s210
          %s212 = smul.addr %s211, 8
          %s213 = scalar_lea.vmem %s1, %s212
          %s214 = sadd.s32 %s21, 1
          %s215 = smul.u32 %s214, 2
        $region32: #{tpu_custom_call.1} parent=23 // pred_fallthru
          _
      $region24: #{tpu_custom_call.1} parent=5 // pred_fallthru
        _
      %p216 = scmp.le.s32.totalorder 1, %s13
      %p217 = scmp.lt.s32.totalorder %s13, 3
      %p218 = pnand %p216, %p217
      %p219 = pneg %p218
      // Predicated region
      $region33: #{tpu_custom_call.1} parent=5 // pred_check
        _
      $region34: #{tpu_custom_call.1} parent=5 // pred_check_branch
        %221 = sbr.rel (%p218) target = $region36
      $region35: #{tpu_custom_call.1} parent=5 // pred_region
        %s222 = ssub.s32 %s13, 1
        %s223 = smul.u32 2, %s23
        %s224 = ssub.s32 3, %s223
        %p225 = scmp.lt.s32.totalorder %s224, 2
        %s226 = scalar_select %p225, %s224, 2
        %s227 = smul.u32 128, %s226
        %p228 = scmp.lt.s32.totalorder %s22, 1
        %s229 = scalar_select %p228, %s22, 1
        %p230 = scmp.lt.s32.totalorder %s223, 2
        %s231 = scalar_select %p230, %s223, 2
        %s232 = smul.addr %s229, 3
        %s233 = sadd.s32 %s231, %s232
        %s234 = smul.addr %s233, 8
        %s235 = scalar_lea.vmem %s0, %s234
        %p236 = pneg %p53
        %p237 = pneg %p50
        %s238 = sadd.s32 %s23, 1
        %s239 = smul.u32 %s238, 2
        %p240 = scmp.lt.s32.totalorder %s22, 1
        %s241 = scalar_select %p240, %s22, 1
        %p242 = scmp.lt.s32.totalorder %s239, 2
        %s243 = scalar_select %p242, %s239, 2
        %s244 = smul.addr %s241, 3
        %s245 = sadd.s32 %s243, %s244
        %s246 = smul.addr %s245, 8
        %s247 = scalar_lea.vmem %s1, %s246
        %p248 = pneg %p85
        %p249 = pneg %p82
        %p250 = pneg %p106
        %p251 = pneg %p103
        %p252 = pneg %p127
        %p253 = pneg %p124
        %p254 = pneg %p155
        %p255 = pneg %p152
        %s256 = sand.u32 %s142, 1
        %s257 = scalar_lea.sflag [#allocation3], %s256
        %s258 = sand.u32 %s142, 1
        %s259 = smul.addr %s258, 16
        %s260 = scalar_lea.vmem [#allocation2], %s259
        %s261 = smul.u32 2, %s23
        %s262 = ssub.s32 3, %s261
        %p263 = scmp.lt.s32.totalorder %s262, 2
        %s264 = scalar_select %p263, %s262, 2
        %s265 = smul.u32 128, %s264
        %p266 = scmp.lt.s32.totalorder %s22, 1
        %s267 = scalar_select %p266, %s22, 1
        %p268 = scmp.lt.s32.totalorder %s261, 2
        %s269 = scalar_select %p268, %s261, 2
        %s270 = smul.addr %s267, 3
        %s271 = sadd.s32 %s269, %s270
        %s272 = smul.addr %s271, 8
        %s273 = scalar_lea.vmem %s0, %s272
        %s274 = smul.u32 2, %s23
        %s275 = ssub.s32 3, %s274
        %p276 = scmp.lt.s32.totalorder %s275, 2
        %s277 = scalar_select %p276, %s275, 2
        %s278 = smul.u32 128, %s277
        %s279 = sadd.s32 %s23, 1
        %s280 = smul.u32 %s279, 2
        %p281 = scmp.lt.s32.totalorder %s22, 1
        %s282 = scalar_select %p281, %s22, 1
        %p283 = scmp.lt.s32.totalorder %s280, 2
        %s284 = scalar_select %p283, %s280, 2
        %s285 = smul.addr %s282, 3
        %s286 = sadd.s32 %s284, %s285
        %s287 = smul.addr %s286, 8
        %s288 = scalar_lea.vmem %s1, %s287
        %s289 = sadd.s32 %s23, 1
        %s290 = smul.u32 %s289, 2
        %s291 = smul.u32 2, %s23
        %v292 = vld [vmem:[%s273] sm:$0xff]
        %v293 = vld [vmem:[%s273 + $0x8] sm:$0xff]
        %v294 = vld [vmem:[%s288] sm:$0xff]
        %v295 = vld [vmem:[%s2] sm:$0xf]
        %s296 = scalar_lea.vmem %s2, 4
        %v297 = vld [vmem:[%s296] sm:$0xf]
        %vm301 = vcmask 1046528
        %v302 = vrot.slane %v292, 1
        %v303 = vrot.slane %v293, 1
        %v304 = vsel %vm301, %v302, %v303
        %v305 = vrot.slane %v294, 1
        %v306 = vsel %vm301, %v303, %v305
        %vm307 = vcmask 31744
        %v308 = vsel %vm307, %v304, 0
        %v310 = vsel %vm307, %v306, 0
        %vm312 = vcmask 1043456
        %v314 = vsel %vm312, %v297, 0
        %316 = vmatprep.subr.mxu0 0.0
        %317 = vmatpush1.msra.mxu0 %v314
        %318 = vmatprep.subr.mxu0 0.0
        %319 = vmatpush1.msra.mxu0 0.0
        %320 = vmatprep.subr.mxu0 0.0
        %321 = vmatpush1.msra.mxu0 0.0
        %322 = vmatprep.subr.mxu0 0.0
        %323 = vmatpush1.msra.mxu0 0.0
        %324 = vmatprep.subr.mxu0 0.0
        %325 = vmatpush1.msra.mxu0 0.0
        %326 = vmatprep.subr.mxu0 0.0
        %327 = vmatpush1.msra.mxu0 0.0
        %328 = vmatprep.subr.mxu0 0.0
        %329 = vmatpush1.msra.mxu0 0.0
        %330 = vmatprep.subr.mxu0 0.0
        %331 = vmatpush1.msra.mxu0 0.0
        %332 = vmatprep.subr.mxu0 0.0
        %333 = vmatpush1.msra.mxu0 0.0
        %334 = vmatprep.subr.mxu0 0.0
        %335 = vmatpush1.msra.mxu0 0.0
        %336 = vmatprep.subr.mxu0 0.0
        %337 = vmatpush1.msra.mxu0 0.0
        %338 = vmatprep.subr.mxu0 0.0
        %339 = vmatpush1.msra.mxu0 0.0
        %340 = vmatprep.subr.mxu0 0.0
        %341 = vmatpush1.msra.mxu0 0.0
        %342 = vmatprep.subr.mxu0 0.0
        %343 = vmatpush1.msra.mxu0 0.0
        %344 = vmatprep.subr.mxu0 0.0
        %345 = vmatpush1.msra.mxu0 0.0
        %346 = vmatprep.subr.mxu0 0.0
        %347 = vmatpush1.msra.mxu0 0.0
        %348 = vmatprep.subr.mxu0 0.0
        %349 = vmatpush1.msra.mxu0 0.0
        %350 = vmatprep.subr.mxu0 0.0
        %351 = vmatpush1.msra.mxu0 0.0
        %352 = vmatprep.subr.mxu0 0.0
        %353 = vmatpush1.msra.mxu0 0.0
        %354 = vmatprep.subr.mxu0 0.0
        %355 = vmatpush1.msra.mxu0 0.0
        %356 = vmatprep.subr.mxu0 0.0
        %357 = vmatpush1.msra.mxu0 0.0
        %358 = vmatprep.subr.mxu0 0.0
        %359 = vmatpush1.msra.mxu0 0.0
        %360 = vmatprep.subr.mxu0 0.0
        %361 = vmatpush1.msra.mxu0 0.0
        %362 = vmatprep.subr.mxu0 0.0
        %363 = vmatpush1.msra.mxu0 0.0
        %364 = vmatprep.subr.mxu0 0.0
        %365 = vmatpush1.msra.mxu0 0.0
        %366 = vmatprep.subr.mxu0 0.0
        %367 = vmatpush1.msra.mxu0 0.0
        %368 = vmatprep.subr.mxu0 0.0
        %369 = vmatpush1.msra.mxu0 0.0
        %370 = vmatprep.subr.mxu0 0.0
        %371 = vmatpush1.msra.mxu0 0.0
        %372 = vmatprep.subr.mxu0 0.0
        %373 = vmatpush1.msra.mxu0 0.0
        %374 = vmatprep.subr.mxu0 0.0
        %375 = vmatpush1.msra.mxu0 0.0
        %376 = vmatprep.subr.mxu0 0.0
        %377 = vmatpush1.msra.mxu0 0.0
        %378 = vmatprep.subr.mxu0 0.0
        %379 = vmatpush1.msra.mxu0 0.0
        %380 = vmatprep.mubr.f32.mxu0 0.0
        %381 = vmatmul.mubr.f32.gmra.mrb[0].mxu0 %v308
        %v382 = vpop.f32.mrb[0].mxu0
        %v383 = vadd.f32 0.0, %v382
        %v384 = vpop.f32.mrb[0].mxu0
        %385 = vmatprep.mubr.f32.mxu0 0.0
        %386 = vmatmul.mubr.f32.gmra.mrb[0].mxu0 %v310
        %v387 = vpop.f32.mrb[0].mxu0
        %v388 = vadd.f32 0.0, %v387
        %v389 = vpop.f32.mrb[0].mxu0
        %390 = vdwg.mxu0
        %v391 = vsel %vm307, %v292, 0
        %v393 = vsel %vm307, %v293, 0
        %v396 = vsel %vm312, %v295, 0
        %398 = vmatprep.subr.mxu0 0.0
        %399 = vmatpush1.msra.mxu0 %v396
        %400 = vmatprep.subr.mxu0 0.0
        %401 = vmatpush1.msra.mxu0 0.0
        %402 = vmatprep.subr.mxu0 0.0
        %403 = vmatpush1.msra.mxu0 0.0
        %404 = vmatprep.subr.mxu0 0.0
        %405 = vmatpush1.msra.mxu0 0.0
        %406 = vmatprep.subr.mxu0 0.0
        %407 = vmatpush1.msra.mxu0 0.0
        %408 = vmatprep.subr.mxu0 0.0
        %409 = vmatpush1.msra.mxu0 0.0
        %410 = vmatprep.subr.mxu0 0.0
        %411 = vmatpush1.msra.mxu0 0.0
        %412 = vmatprep.subr.mxu0 0.0
        %413 = vmatpush1.msra.mxu0 0.0
        %414 = vmatprep.subr.mxu0 0.0
        %415 = vmatpush1.msra.mxu0 0.0
        %416 = vmatprep.subr.mxu0 0.0
        %417 = vmatpush1.msra.mxu0 0.0
        %418 = vmatprep.subr.mxu0 0.0
        %419 = vmatpush1.msra.mxu0 0.0
        %420 = vmatprep.subr.mxu0 0.0
        %421 = vmatpush1.msra.mxu0 0.0
        %422 = vmatprep.subr.mxu0 0.0
        %423 = vmatpush1.msra.mxu0 0.0
        %424 = vmatprep.subr.mxu0 0.0
        %425 = vmatpush1.msra.mxu0 0.0
        %426 = vmatprep.subr.mxu0 0.0
        %427 = vmatpush1.msra.mxu0 0.0
        %428 = vmatprep.subr.mxu0 0.0
        %429 = vmatpush1.msra.mxu0 0.0
        %430 = vmatprep.subr.mxu0 0.0
        %431 = vmatpush1.msra.mxu0 0.0
        %432 = vmatprep.subr.mxu0 0.0
        %433 = vmatpush1.msra.mxu0 0.0
        %434 = vmatprep.subr.mxu0 0.0
        %435 = vmatpush1.msra.mxu0 0.0
        %436 = vmatprep.subr.mxu0 0.0
        %437 = vmatpush1.msra.mxu0 0.0
        %438 = vmatprep.subr.mxu0 0.0
        %439 = vmatpush1.msra.mxu0 0.0
        %440 = vmatprep.subr.mxu0 0.0
        %441 = vmatpush1.msra.mxu0 0.0
        %442 = vmatprep.subr.mxu0 0.0
        %443 = vmatpush1.msra.mxu0 0.0
        %444 = vmatprep.subr.mxu0 0.0
        %445 = vmatpush1.msra.mxu0 0.0
        %446 = vmatprep.subr.mxu0 0.0
        %447 = vmatpush1.msra.mxu0 0.0
        %448 = vmatprep.subr.mxu0 0.0
        %449 = vmatpush1.msra.mxu0 0.0
        %450 = vmatprep.subr.mxu0 0.0
        %451 = vmatpush1.msra.mxu0 0.0
        %452 = vmatprep.subr.mxu0 0.0
        %453 = vmatpush1.msra.mxu0 0.0
        %454 = vmatprep.subr.mxu0 0.0
        %455 = vmatpush1.msra.mxu0 0.0
        %456 = vmatprep.subr.mxu0 0.0
        %457 = vmatpush1.msra.mxu0 0.0
        %458 = vmatprep.subr.mxu0 0.0
        %459 = vmatpush1.msra.mxu0 0.0
        %460 = vmatprep.subr.mxu0 0.0
        %461 = vmatpush1.msra.mxu0 0.0
        %462 = vmatprep.mubr.f32.mxu0 0.0
        %463 = vmatmul.mubr.f32.gmra.mrb[0].mxu0 %v391
        %v464 = vpop.f32.mrb[0].mxu0
        %v465 = vadd.f32 %v383, %v464
        %v466 = vpop.f32.mrb[0].mxu0
        %467 = vmatprep.mubr.f32.mxu0 0.0
        %468 = vmatmul.mubr.f32.gmra.mrb[0].mxu0 %v393
        %v469 = vpop.f32.mrb[0].mxu0
        %v470 = vadd.f32 %v388, %v469
        %v471 = vpop.f32.mrb[0].mxu0
        %472 = vdwg.mxu0
        %v473 = vld [vmem:[%s3] sm:$0x1]
        %v475 = vlaneseq
        %v476 = vshrl.u32 %v475, 7
        %v477 = vsub.s32 0, %v476
        %v478 = vrot.slane %v473, %v477
        %v480 = vadd.f32 %v465, %v478
        %v481 = vadd.f32 %v470, %v478
        %482 = vst [vmem:[%s260] sm:$0xff] %v480
        %483 = vst [vmem:[%s260 + $0x8] sm:$0xff] %v481
        %s484 = sand.u32 %s142, 1
        %s485 = scalar_lea.sflag [#allocation3], %s484
        %s486 = sand.u32 %s142, 1
        %s487 = smul.addr %s486, 16
        %s488 = scalar_lea.vmem [#allocation2], %s487
        // Predicated region
        $region37: #{tpu_custom_call.1} parent=35 // pred_check
          %p489 = pneg %p152
        $region38: #{tpu_custom_call.1} parent=35 // pred_check_branch
          %491 = sbr.rel (%p489) target = $region40
        $region39: #{tpu_custom_call.1} parent=35 // pred_region
          %s492 = smul.u32 2, %s23
          %s494 = ssub.s32 256, 256
          %495 = vsyncadd %s485, %s494
          %s496 = smul.addr %s22, 2
          %s497 = sadd.s32 %s492, %s496
          %s498 = smul.addr %s497, 128
          %s499 = scalar_lea.hbm %s4, %s498
          %s500 = sshll.u32 %s488, 4
          %s501 = int_to_ptr.vmem [resolvable:$true] %s500
          %506 = dma.vmem_to_hbm [thread:$0]  %s501, 256, %s499, %s485, 128, 128, 8
        $region40: #{tpu_custom_call.1} parent=35 // pred_fallthru
          _
      $region36: #{tpu_custom_call.1} parent=5 // pred_fallthru
        _
      %p507 = scmp.le.s32.totalorder 2, %s13
      // Predicated region
      $region41: #{tpu_custom_call.1} parent=5 // pred_check
        %p508 = pneg %p507
      $region42: #{tpu_custom_call.1} parent=5 // pred_check_branch
        %510 = sbr.rel (%p508) target = $region44
      $region43: #{tpu_custom_call.1} parent=5 // pred_region
        %s511 = ssub.s32 %s13, 2
        // Predicated region
        $region45: #{tpu_custom_call.1} parent=43 // pred_check
          %p512 = pneg %p158
        $region46: #{tpu_custom_call.1} parent=43 // pred_check_branch
          %514 = sbr.rel (%p512) target = $region48
        $region47: #{tpu_custom_call.1} parent=43 // pred_region
          %s515 = sand.u32 %s143, 1
          %s516 = scalar_lea.sflag [#allocation3], %s515
          %s517 = sand.u32 %s143, 1
          %s518 = smul.addr %s517, 16
          %s519 = scalar_lea.vmem [#allocation2], %s518
          %520 = dma.done %s516, 256
        $region48: #{tpu_custom_call.1} parent=43 // pred_fallthru
          _
      $region44: #{tpu_custom_call.1} parent=5 // pred_fallthru
        _
    $region6: #{tpu_custom_call.1} parent=1 // loop_footer
      %s17 = sadd.s32 1, %s13
    $region7: #{tpu_custom_call.1} parent=1 // loop_footer_branch
      %12 = sbr.rel target = $region3
    $region8: #{tpu_custom_call.1} parent=1 // loop_exit
      _
    %521 = vsyncpa [#allocation3], 1
    %s522 = scalar_lea.sflag [#allocation3], 1
    %523 = vsyncpa %s522, 1

</llo_original>
